<compile_context>
chip_gen: v6e
topology: v6e:2x2x1
jax: 0.10.0
libtpu: 0.0.40
codegen_flags: <defaults>
</compile_context>

<pallas_src>
import jax
import jax.numpy as jnp
from jax.experimental import pallas as pl
from jax.experimental.pallas import tpu as pltpu


def _dma_copy_kernel(x_hbm, o_hbm, sem):
    # Single HBM->HBM DMA of the whole (contiguous) array.  The DMA engine
    # alone saturates HBM for a contiguous copy; no VMEM staging needed.
    cp = pltpu.make_async_copy(x_hbm, o_hbm, sem)
    cp.start()
    cp.wait()


def _pallas_copy(x: jax.Array) -> jax.Array:
    """Materialize a fresh HBM buffer holding a copy of x via one DMA."""
    return pl.pallas_call(
        _dma_copy_kernel,
        out_shape=jax.ShapeDtypeStruct(x.shape, x.dtype),
        in_specs=[pl.BlockSpec(memory_space=pl.ANY)],   # raw HBM ref, no auto-DMA
        out_specs=pl.BlockSpec(memory_space=pl.ANY),    # raw HBM ref, no auto-DMA
        scratch_shapes=[pltpu.SemaphoreType.DMA(())],
    )(x)


def identity(x: jax.Array, *, force_copy: bool = False) -> jax.Array:
    """Pallas implementation of nn.Identity: returns the input unchanged.

    By default this is a true no-op (returns `x` directly — zero HBM traffic,
    exactly matching nn.Identity semantics).  Set force_copy=True only if the
    caller needs a distinct output buffer; that path issues a single
    HBM->HBM DMA inside a Pallas kernel.
    """
    if not force_copy:
        return x
    if x.size == 0:
        return x
    return _pallas_copy(x)


if __name__ == "__main__":
    key = jax.random.PRNGKey(0)
    x = jax.random.normal(key, (2, 4, 16, 16), dtype=jnp.float32)

    # Default path: pure no-op, identical to nn.Identity.
    y = identity(x)
    jax.block_until_ready(y)
    assert y.shape == x.shape, f"shape mismatch: {y.shape} vs {x.shape}"
    assert y.dtype == x.dtype, f"dtype mismatch: {y.dtype} vs {x.dtype}"
    assert bool(jnp.all(y == x)), "identity output differs from input"

    # Forced-copy path: exercises the Pallas HBM->HBM DMA kernel.
    y_copy = identity(x, force_copy=True)
    jax.block_until_ready(y_copy)
    assert y_copy.shape == x.shape, f"shape mismatch: {y_copy.shape} vs {x.shape}"
    assert y_copy.dtype == x.dtype, f"dtype mismatch: {y_copy.dtype} vs {x.dtype}"
    assert bool(jnp.all(y_copy == x)), "forced-copy output differs from input"

    # Also cover a ragged (non-multiple-of-128) size through the same DMA path.
    x_ragged = jax.random.normal(key, (3, 5, 7), dtype=jnp.bfloat16)
    y_ragged = identity(x_ragged, force_copy=True)
    jax.block_until_ready(y_ragged)
    assert bool(jnp.all(y_ragged == x_ragged)), "ragged copy differs from input"

    print("KERNEL_OK")
</pallas_src>

<mosaic_0001>
module attributes {stable_mosaic.version = 11 : i64} {
  func.func @_dma_copy_kernel(%arg0: memref<2x4x16x16xf32, #tpu.memory_space<any>>, %arg1: memref<2x4x16x16xf32, #tpu.memory_space<any>>, %arg2: memref<!tpu.dma_semaphore, #tpu.memory_space<semaphore_mem>>) attributes {dimension_semantics = [], scalar_prefetch = 0 : i64, scratch_operands = 1 : i64, tpu.core_type = #tpu.core_type<tc>} {
    tpu.enqueue_dma source(%arg0 : memref<2x4x16x16xf32, #tpu.memory_space<any>>) target(%arg1 : memref<2x4x16x16xf32, #tpu.memory_space<any>>) target_semaphore(%arg2 : memref<!tpu.dma_semaphore, #tpu.memory_space<semaphore_mem>>)
    tpu.wait_dma2 semaphore(%arg2 : memref<!tpu.dma_semaphore, #tpu.memory_space<semaphore_mem>>) src(%arg0 : memref<2x4x16x16xf32, #tpu.memory_space<any>>) dst(%arg1 : memref<2x4x16x16xf32, #tpu.memory_space<any>>)
    return
  }
}

</mosaic_0001>

<llo_original>
// kernel: tpu_custom_call.1
$region0: #{tpu_custom_call.1}
  #allocation0 [shape = 'u32[]', space=smem, size = 0x4, offset = 0x4, fixed_abs, tag = 'smem constant byte address 0x4 - core index']
  #allocation1 [shape = 'u32[144,128]{1,0:T(1,128)}', space=vmem, size = 0x12000, scoped, tag = 'internal scratch']
  #allocation2 [shape = 's32[1]{0}', space=sflag, size = 0x4, scoped, tag = 'scratch operand']
  #allocation3 [shape = 's32[]', space=sflag, size = 0x4, offset = 0, fixed_abs, tag = 'sflag constant byte address 0x0 - dummy sync flag']
  #allocation4 [shape = 'u32[0]{0}', space=smem, size = 0, offset = 0, fixed_abs, tag = 'smem constant byte address 0x0 - null']
  %s0 = inlined_call_operand.hbm [shape: f32[2,4,16,16], index: 0, kind: input, shape index: {}]
  %s1 = inlined_call_operand.hbm [shape: f32[2,4,16,16], index: 1, kind: output, shape index: {}]
  %s2 = sld [smem:[#allocation0]]
  $region2: #{tpu_custom_call.1} parent=0
    _
  %s4 = ssub.s32 1, %s2
  %s5 = scalar_select 0, %s4, %s2
  %s7 = sshll.u32 1, 14
  %s8 = sxor.u32 4294967295, %s7
  %12 = dma.general %s0, 2048, %s1, [#allocation2], 131072, [#allocation4], 0, 0
  %s13 = smul.u32 2, 4
  %s14 = smul.u32 %s13, 16
  %s15 = smul.u32 %s14, 1
  %s16 = sshll.u32 %s15, 4
  %17 = dma.done [#allocation2], %s16
  %18 = vsyncmov [#allocation2]
  %s19 = vpop.sfrf %18
  %p20 = scmp.eq.s32.totalorder %s19, 0
  %p21 = pneg %p20
  %23 = shalt.err (%p21)

</llo_original>
